<compile_context>
chip_gen: v7x
topology: tpu7x:2x2x1
jax: 0.10.0
libtpu: 0.0.40
codegen_flags: <defaults>
</compile_context>

<pallas_src>
import functools
import numpy as np
import jax
import jax.numpy as jnp
from jax.experimental import pallas as pl
from jax.experimental.pallas import tpu as pltpu

LANE = 128        # lane width: embedding dim padded to this -> unmasked vst stores
ROW_ALIGN = 16    # bf16 sublane pack: keeps concat offsets / MXU rows / output split aligned
TARGET_TM = 256   # rows per branch per grid step (256-512-class tiles ~85% HBM roofline)


# ----------------------------- helpers ----------------------------------------
def _round_up(n, m):
    return (n + m - 1) // m * m


def _nbytes(a):
    return int(np.prod(a.shape)) * a.dtype.itemsize


def _use_bf16_elementwise() -> bool:
    """bf16 VALU exists on v6e/v7x; v5e (and older) must keep elementwise in f32."""
    try:
        kind = jax.devices()[0].device_kind.lower()
    except Exception:
        return False
    return ("v6" in kind) or ("v7" in kind) or ("7x" in kind)


def _pad_last(a, n):
    p = n - a.shape[-1]
    return a if p <= 0 else jnp.pad(a, [(0, 0)] * (a.ndim - 1) + [(0, p)])


def _pad_rows(a, n):
    p = n - a.shape[0]
    return a if p <= 0 else jnp.pad(a, [(0, p)] + [(0, 0)] * (a.ndim - 1))


def _row_tiling(B):
    """(padded_rows, row_tile): rows padded to ROW_ALIGN, tiled at <= TARGET_TM."""
    Bp = _round_up(max(B, 1), ROW_ALIGN)
    if Bp <= TARGET_TM:
        return Bp, Bp
    return _round_up(Bp, TARGET_TM), TARGET_TM


def _vmem_budget(tm, D, Ep, weights, *, n_branches, in_itemsize, scratch_bytes):
    w_bytes = sum(_nbytes(w) for w in weights)
    budget = (
        2 * w_bytes                               # weight blocks (+pipeline headroom)
        + 2 * n_branches * tm * D * in_itemsize   # input tiles, double-buffered
        + 2 * n_branches * tm * Ep * 4            # f32 output tiles, double-buffered
        + scratch_bytes                           # bf16 fused-branch scratch
        + (4 << 20))                              # intermediates / compiler scratch
    # floor at 16 MiB (plenty of slack), cap at v7x's 64 MiB physical VMEM
    return int(min(max(budget, 16 << 20), 64 << 20))


def _prep_params(params):
    w1, b1, w2, b2 = params
    D, H = w1.shape
    E = w2.shape[1]
    Ep = max(LANE, _round_up(E, LANE))            # lane-dense output width
    return w1, b1, _pad_last(w2, Ep), _pad_last(b2, Ep), D, H, E, Ep


# ----------------------------- kernels -----------------------------------------
def _mlp_block(x_bf16, w1_ref, b1_ref, w2_ref, b2_ref, *, bf16_elem):
    # bf16 MXU operands, f32 accumulation on all generations.
    h = jnp.dot(x_bf16, w1_ref[...], preferred_element_type=jnp.float32)
    if bf16_elem:
        # v6e/v7x: bf16 VALU -> bias+ReLU in bf16 (half the VALU/vreg pressure,
        # no separate f32->bf16 pack pass before the second matmul).
        h = jnp.maximum(h.astype(jnp.bfloat16) + b1_ref[...].astype(jnp.bfloat16), 0.0)
    else:
        # v5e: no bf16 VALU -> keep elementwise in f32, cast only at the MXU boundary.
        h = jnp.maximum(h + b1_ref[...], 0.0).astype(jnp.bfloat16)
    return jnp.dot(h, w2_ref[...], preferred_element_type=jnp.float32) + b2_ref[...]


def _siamese_kernel(x1_ref, x2_ref, w1_ref, b1_ref, w2_ref, b2_ref,
                    out1_ref, out2_ref, xcat_ref, *, bf16_elem):
    tm = x1_ref.shape[0]
    # Cast each branch to bf16 and write it into a shared bf16 scratch at
    # sublane-aligned row offsets (tm % 16 == 0): one fused MXU pass over the
    # shared weights, with no f32 concatenate copy or relayout.
    xcat_ref[:tm, :] = x1_ref[...].astype(jnp.bfloat16)
    xcat_ref[tm:, :] = x2_ref[...].astype(jnp.bfloat16)
    o = _mlp_block(xcat_ref[...], w1_ref, b1_ref, w2_ref, b2_ref, bf16_elem=bf16_elem)
    out1_ref[...] = o[:tm, :].astype(out1_ref.dtype)
    out2_ref[...] = o[tm:, :].astype(out2_ref.dtype)


def _embed_kernel(x_ref, w1_ref, b1_ref, w2_ref, b2_ref, out_ref, *, bf16_elem):
    o = _mlp_block(x_ref[...].astype(jnp.bfloat16), w1_ref, b1_ref, w2_ref, b2_ref,
                   bf16_elem=bf16_elem)
    out_ref[...] = o.astype(out_ref.dtype)


# ----------------------------- wrappers -----------------------------------------
def siamese_forward(x1, x2, params):
    """SiameseNet.forward: shared embedding_net applied to x1 and x2 (fused)."""
    assert x1.shape == x2.shape
    B = x1.shape[0]
    D = int(np.prod(x1.shape[1:]))
    w1, b1, w2p, b2p, Dw, H, E, Ep = _prep_params(params)
    assert D == Dw
    Bp, tm = _row_tiling(B)
    nb = Bp // tm
    x1p = _pad_rows(x1.reshape(B, D), Bp)
    x2p = _pad_rows(x2.reshape(B, D), Bp)

    scratch_bytes = 2 * tm * D * 2  # (2*tm, D) bf16
    vmem_bytes = _vmem_budget(tm, D, Ep, (w1, b1, w2p, b2p), n_branches=2,
                              in_itemsize=x1p.dtype.itemsize,
                              scratch_bytes=scratch_bytes)
    rows = 2 * Bp
    flops = 2 * rows * D * H + 2 * rows * H * Ep
    bytes_accessed = int(_nbytes(x1p) + _nbytes(x2p) + _nbytes(w1) + _nbytes(b1)
                         + _nbytes(w2p) + _nbytes(b2p) + rows * Ep * 4)

    kernel = functools.partial(_siamese_kernel, bf16_elem=_use_bf16_elementwise())
    out1, out2 = pl.pallas_call(
        kernel,
        out_shape=(jax.ShapeDtypeStruct((Bp, Ep), jnp.float32),
                   jax.ShapeDtypeStruct((Bp, Ep), jnp.float32)),
        grid_spec=pltpu.PrefetchScalarGridSpec(
            num_scalar_prefetch=0,
            grid=(nb,),
            in_specs=[
                pl.BlockSpec((tm, D), lambda i: (i, 0)),   # x1 row tile
                pl.BlockSpec((tm, D), lambda i: (i, 0)),   # x2 row tile
                pl.BlockSpec((D, H), lambda i: (0, 0)),    # w1 resident
                pl.BlockSpec((1, H), lambda i: (0, 0)),    # b1 resident
                pl.BlockSpec((H, Ep), lambda i: (0, 0)),   # w2 (lane-padded) resident
                pl.BlockSpec((1, Ep), lambda i: (0, 0)),   # b2 (lane-padded) resident
            ],
            out_specs=[
                pl.BlockSpec((tm, Ep), lambda i: (i, 0)),
                pl.BlockSpec((tm, Ep), lambda i: (i, 0)),
            ],
            scratch_shapes=[pltpu.VMEM((2 * tm, D), jnp.bfloat16)],
        ),
        compiler_params=pltpu.CompilerParams(
            dimension_semantics=("parallel",),
            vmem_limit_bytes=vmem_bytes),
        cost_estimate=pl.CostEstimate(flops=flops, transcendentals=0,
                                      bytes_accessed=bytes_accessed),
    )(x1p, x2p, w1, b1, w2p, b2p)

    # TODO(synk): consumers that can work on the lane-padded (Bp, 128) slabs should
    # take out1/out2 directly so this slice fuses away.
    return out1[:B, :E], out2[:B, :E]


def get_embedding(x, params):
    """SiameseNet.get_embedding: single-branch path (no redundant 2x work)."""
    B = x.shape[0]
    D = int(np.prod(x.shape[1:]))
    w1, b1, w2p, b2p, Dw, H, E, Ep = _prep_params(params)
    assert D == Dw
    Bp, tm = _row_tiling(B)
    nb = Bp // tm
    xp = _pad_rows(x.reshape(B, D), Bp)

    vmem_bytes = _vmem_budget(tm, D, Ep, (w1, b1, w2p, b2p), n_branches=1,
                              in_itemsize=xp.dtype.itemsize, scratch_bytes=0)
    flops = 2 * Bp * D * H + 2 * Bp * H * Ep
    bytes_accessed = int(_nbytes(xp) + _nbytes(w1) + _nbytes(b1)
                         + _nbytes(w2p) + _nbytes(b2p) + Bp * Ep * 4)

    kernel = functools.partial(_embed_kernel, bf16_elem=_use_bf16_elementwise())
    out = pl.pallas_call(
        kernel,
        out_shape=jax.ShapeDtypeStruct((Bp, Ep), jnp.float32),
        grid_spec=pltpu.PrefetchScalarGridSpec(
            num_scalar_prefetch=0,
            grid=(nb,),
            in_specs=[
                pl.BlockSpec((tm, D), lambda i: (i, 0)),
                pl.BlockSpec((D, H), lambda i: (0, 0)),
                pl.BlockSpec((1, H), lambda i: (0, 0)),
                pl.BlockSpec((H, Ep), lambda i: (0, 0)),
                pl.BlockSpec((1, Ep), lambda i: (0, 0)),
            ],
            out_specs=pl.BlockSpec((tm, Ep), lambda i: (i, 0)),
        ),
        compiler_params=pltpu.CompilerParams(
            dimension_semantics=("parallel",),
            vmem_limit_bytes=vmem_bytes),
        cost_estimate=pl.CostEstimate(flops=flops, transcendentals=0,
                                      bytes_accessed=bytes_accessed),
    )(xp, w1, b1, w2p, b2p)
    return out[:B, :E]


def init_params(key, in_dim, hidden, embed):
    k1, k2, k3, k4 = jax.random.split(key, 4)
    lim1 = 1.0 / np.sqrt(in_dim)
    lim2 = 1.0 / np.sqrt(hidden)
    # Weights stored bf16 (halves weight DMA, MXU-native); biases stay f32.
    # Intentional deviation from an f32 PyTorch module beyond matmul rounding.
    w1 = jax.random.uniform(k1, (in_dim, hidden), jnp.float32, -lim1, lim1).astype(jnp.bfloat16)
    b1 = jax.random.uniform(k2, (1, hidden), jnp.float32, -lim1, lim1)
    w2 = jax.random.uniform(k3, (hidden, embed), jnp.float32, -lim2, lim2).astype(jnp.bfloat16)
    b2 = jax.random.uniform(k4, (1, embed), jnp.float32, -lim2, lim2)
    return (w1, b1, w2, b2)


# ----------------------------- demo / check -------------------------------------
if __name__ == "__main__":
    key = jax.random.PRNGKey(0)
    kx1, kx2, kp = jax.random.split(key, 3)

    N, C, Hs, Ws = 2, 4, 16, 16          # NCHW, like the PyTorch module's input
    hidden, embed = 128, 32
    D = C * Hs * Ws

    x1 = jax.random.normal(kx1, (N, C, Hs, Ws), jnp.float32)
    x2 = jax.random.normal(kx2, (N, C, Hs, Ws), jnp.float32)
    params = init_params(kp, D, hidden, embed)

    fwd = jax.jit(siamese_forward)
    emb = jax.jit(get_embedding)

    out1, out2 = fwd(x1, x2, params)
    e1 = emb(x1, params)
    out1, out2, e1 = jax.block_until_ready((out1, out2, e1))

    # pure-JAX reference (same bf16-stored weights, f32 elementwise)
    w1f = params[0].astype(jnp.float32)
    w2f = params[2].astype(jnp.float32)

    def ref_embed(x):
        xf = x.reshape(-1, D)
        h = jnp.maximum(xf @ w1f + params[1], 0.0)
        return h @ w2f + params[3]

    r1, r2 = ref_embed(x1), ref_embed(x2)
    assert out1.shape == (N, embed) and out2.shape == (N, embed)
    # bf16 matmul operands (+ bf16 bias/ReLU on v6e/v7x) -> loosened tolerances
    np.testing.assert_allclose(np.asarray(out1), np.asarray(r1), rtol=2e-2, atol=2e-2)
    np.testing.assert_allclose(np.asarray(out2), np.asarray(r2), rtol=2e-2, atol=2e-2)
    # single-branch path must match the fused siamese path (same per-row compute)
    np.testing.assert_allclose(np.asarray(e1), np.asarray(out1), rtol=1e-5, atol=1e-5)

    print("KERNEL_OK")
</pallas_src>

<mosaic_0001>
module attributes {stable_mosaic.version = 11 : i64} {
  func.func @_siamese_kernel(%arg0: i32, %arg1: memref<16x1024xf32, #tpu.memory_space<vmem>>, %arg2: memref<16x1024xf32, #tpu.memory_space<vmem>>, %arg3: memref<1024x128xbf16, #tpu.memory_space<vmem>>, %arg4: memref<1x128xf32, #tpu.memory_space<vmem>>, %arg5: memref<128x128xbf16, #tpu.memory_space<vmem>>, %arg6: memref<1x128xf32, #tpu.memory_space<vmem>>, %arg7: memref<16x128xf32, #tpu.memory_space<vmem>>, %arg8: memref<16x128xf32, #tpu.memory_space<vmem>>, %arg9: memref<32x1024xbf16, #tpu.memory_space<vmem>>) attributes {dimension_semantics = [#tpu.dimension_semantics<parallel>], iteration_bounds = array<i64: 1>, scalar_prefetch = 0 : i64, scratch_operands = 1 : i64, tpu.core_type = #tpu.core_type<tc>, window_params = [{transform_indices = @transform_0, window_bounds = array<i64: 16, 1024>}, {transform_indices = @transform_1, window_bounds = array<i64: 16, 1024>}, {pipeline_mode = #tpu.pipeline_mode<synchronous>, transform_indices = @transform_2, window_bounds = array<i64: 1024, 128>}, {pipeline_mode = #tpu.pipeline_mode<synchronous>, transform_indices = @transform_3, window_bounds = array<i64: 1, 128>}, {pipeline_mode = #tpu.pipeline_mode<synchronous>, transform_indices = @transform_4, window_bounds = array<i64: 128, 128>}, {pipeline_mode = #tpu.pipeline_mode<synchronous>, transform_indices = @transform_5, window_bounds = array<i64: 1, 128>}, {transform_indices = @transform_6, window_bounds = array<i64: 16, 128>}, {transform_indices = @transform_7, window_bounds = array<i64: 16, 128>}]} {
    %c0 = arith.constant 0 : index
    %c0_0 = arith.constant 0 : index
    %0 = vector.load %arg1[%c0, %c0_0] : memref<16x1024xf32, #tpu.memory_space<vmem>>, vector<16x1024xf32>
    %1 = arith.truncf %0 : vector<16x1024xf32> to vector<16x1024xbf16>
    %c0_1 = arith.constant 0 : index
    %c0_2 = arith.constant 0 : index
    %2 = vector.load %arg9[%c0_1, %c0_2] : memref<32x1024xbf16, #tpu.memory_space<vmem>>, vector<16x1024xbf16>
    tpu.vector_store %arg9[%c0_1, %c0_2], %1 {strides = array<i32>} : memref<32x1024xbf16, #tpu.memory_space<vmem>>, vector<16x1024xbf16>,
    %c0_3 = arith.constant 0 : index
    %c0_4 = arith.constant 0 : index
    %3 = vector.load %arg2[%c0_3, %c0_4] : memref<16x1024xf32, #tpu.memory_space<vmem>>, vector<16x1024xf32>
    %4 = arith.truncf %3 : vector<16x1024xf32> to vector<16x1024xbf16>
    %c16 = arith.constant 16 : index
    %c0_5 = arith.constant 0 : index
    %5 = vector.load %arg9[%c16, %c0_5] : memref<32x1024xbf16, #tpu.memory_space<vmem>>, vector<16x1024xbf16>
    tpu.vector_store %arg9[%c16, %c0_5], %4 {strides = array<i32>} : memref<32x1024xbf16, #tpu.memory_space<vmem>>, vector<16x1024xbf16>,
    %c0_6 = arith.constant 0 : index
    %c0_7 = arith.constant 0 : index
    %6 = vector.load %arg9[%c0_6, %c0_7] : memref<32x1024xbf16, #tpu.memory_space<vmem>>, vector<32x1024xbf16>
    %c0_8 = arith.constant 0 : index
    %c0_9 = arith.constant 0 : index
    %7 = vector.load %arg3[%c0_8, %c0_9] : memref<1024x128xbf16, #tpu.memory_space<vmem>>, vector<1024x128xbf16>
    %cst = arith.constant dense<0.000000e+00> : vector<32x128xf32>
    %8 = tpu.matmul %6, %7, %cst {dimension_numbers = #tpu.dot_dimension_numbers<[1], [0], [0], [1], [0, 0, 1, 1], [], []>} : vector<32x1024xbf16>, vector<1024x128xbf16>, vector<32x128xf32> -> vector<32x128xf32>
    %c0_10 = arith.constant 0 : index
    %c0_11 = arith.constant 0 : index
    %9 = vector.load %arg4[%c0_10, %c0_11] : memref<1x128xf32, #tpu.memory_space<vmem>>, vector<1x128xf32>
    %10 = vector.broadcast %9 : vector<1x128xf32> to vector<32x128xf32>
    %11 = arith.addf %8, %10 : vector<32x128xf32>
    %cst_12 = arith.constant 0.000000e+00 : f32
    %12 = vector.broadcast %cst_12 : f32 to vector<32x128xf32>
    %13 = arith.maximumf %11, %12 : vector<32x128xf32>
    %14 = arith.truncf %13 : vector<32x128xf32> to vector<32x128xbf16>
    %c0_13 = arith.constant 0 : index
    %c0_14 = arith.constant 0 : index
    %15 = vector.load %arg5[%c0_13, %c0_14] : memref<128x128xbf16, #tpu.memory_space<vmem>>, vector<128x128xbf16>
    %cst_15 = arith.constant dense<0.000000e+00> : vector<32x128xf32>
    %16 = tpu.matmul %14, %15, %cst_15 {dimension_numbers = #tpu.dot_dimension_numbers<[1], [0], [0], [1], [0, 0, 1, 1], [], []>} : vector<32x128xbf16>, vector<128x128xbf16>, vector<32x128xf32> -> vector<32x128xf32>
    %c0_16 = arith.constant 0 : index
    %c0_17 = arith.constant 0 : index
    %17 = vector.load %arg6[%c0_16, %c0_17] : memref<1x128xf32, #tpu.memory_space<vmem>>, vector<1x128xf32>
    %18 = vector.broadcast %17 : vector<1x128xf32> to vector<32x128xf32>
    %19 = arith.addf %16, %18 : vector<32x128xf32>
    %20 = vector.extract_strided_slice %19 {offsets = [0, 0], sizes = [16, 128], strides = [1, 1]} : vector<32x128xf32> to vector<16x128xf32>
    %c0_18 = arith.constant 0 : index
    %c0_19 = arith.constant 0 : index
    %21 = vector.load %arg7[%c0_18, %c0_19] : memref<16x128xf32, #tpu.memory_space<vmem>>, vector<16x128xf32>
    tpu.vector_store %arg7[%c0_18, %c0_19], %20 {strides = array<i32>} : memref<16x128xf32, #tpu.memory_space<vmem>>, vector<16x128xf32>,
    %22 = vector.extract_strided_slice %19 {offsets = [16, 0], sizes = [16, 128], strides = [1, 1]} : vector<32x128xf32> to vector<16x128xf32>
    %c0_20 = arith.constant 0 : index
    %c0_21 = arith.constant 0 : index
    %23 = vector.load %arg8[%c0_20, %c0_21] : memref<16x128xf32, #tpu.memory_space<vmem>>, vector<16x128xf32>
    tpu.vector_store %arg8[%c0_20, %c0_21], %22 {strides = array<i32>} : memref<16x128xf32, #tpu.memory_space<vmem>>, vector<16x128xf32>,
    return
  }
  func.func @transform_0(%arg0: i32) -> (i32, i32) {
    %c0_i32 = arith.constant 0 : i32
    %c0_i32_0 = arith.constant 0 : i32
    return %arg0, %c0_i32 : i32, i32
  }
  func.func @transform_1(%arg0: i32) -> (i32, i32) {
    %c0_i32 = arith.constant 0 : i32
    %c0_i32_0 = arith.constant 0 : i32
    return %arg0, %c0_i32 : i32, i32
  }
  func.func @transform_2(%arg0: i32) -> (i32, i32) {
    %c0_i32 = arith.constant 0 : i32
    %c0_i32_0 = arith.constant 0 : i32
    %c0_i32_1 = arith.constant 0 : i32
    return %c0_i32, %c0_i32_0 : i32, i32
  }
  func.func @transform_3(%arg0: i32) -> (i32, i32) {
    %c0_i32 = arith.constant 0 : i32
    %c0_i32_0 = arith.constant 0 : i32
    %c0_i32_1 = arith.constant 0 : i32
    return %c0_i32, %c0_i32_0 : i32, i32
  }
  func.func @transform_4(%arg0: i32) -> (i32, i32) {
    %c0_i32 = arith.constant 0 : i32
    %c0_i32_0 = arith.constant 0 : i32
    %c0_i32_1 = arith.constant 0 : i32
    return %c0_i32, %c0_i32_0 : i32, i32
  }
  func.func @transform_5(%arg0: i32) -> (i32, i32) {
    %c0_i32 = arith.constant 0 : i32
    %c0_i32_0 = arith.constant 0 : i32
    %c0_i32_1 = arith.constant 0 : i32
    return %c0_i32, %c0_i32_0 : i32, i32
  }
  func.func @transform_6(%arg0: i32) -> (i32, i32) {
    %c0_i32 = arith.constant 0 : i32
    %c0_i32_0 = arith.constant 0 : i32
    return %arg0, %c0_i32 : i32, i32
  }
  func.func @transform_7(%arg0: i32) -> (i32, i32) {
    %c0_i32 = arith.constant 0 : i32
    %c0_i32_0 = arith.constant 0 : i32
    return %arg0, %c0_i32 : i32, i32
  }
}

</mosaic_0001>

<llo_original>
// kernel: siamese_forward.1
$region0: #{siamese_forward.1}
  #allocation0 [shape = 'u32[]', space=smem, size = 0x4, offset = 0x4, fixed_abs, tag = 'smem constant byte address 0x4 - core index']
  #allocation1 [shape = 'u32[144,128]{1,0:T(1,128)}', space=vmem, size = 0x12000, scoped, tag = 'internal scratch']
  #allocation2 [shape = 'bf16[32,1024]{1,0:T(16,128)(2,1)}', space=vmem, size = 0x10000, scoped, tag = 'scratch operand']
  %s0 = inlined_call_operand.vmem [shape: f32[16,1024], index: 0, kind: input, shape index: {}]
  %s1 = inlined_call_operand.vmem [shape: f32[16,1024], index: 1, kind: input, shape index: {}]
  %s2 = inlined_call_operand.vmem [shape: bf16[1024,128], index: 2, kind: input, shape index: {}]
  %s3 = inlined_call_operand.vmem [shape: f32[1,128], index: 3, kind: input, shape index: {}]
  %s4 = inlined_call_operand.vmem [shape: bf16[128,128], index: 4, kind: input, shape index: {}]
  %s5 = inlined_call_operand.vmem [shape: f32[1,128], index: 5, kind: input, shape index: {}]
  %s6 = inlined_call_operand.vmem [shape: f32[16,128], index: 6, kind: output, shape index: {0}]
  %s7 = inlined_call_operand.vmem [shape: f32[16,128], index: 7, kind: output, shape index: {1}]
  %8 = xla_tuple %s6, %s7
  %s9 = sld [smem:[#allocation0]]
  $region42: #{siamese_forward.1} parent=0
    _
  %s11 = ssub.s32 1, %s9
  %s12 = scalar_select 0, %s11, %s9
  // Predicated region
  $region2: #{siamese_forward.1} parent=0 // pred_check
    _
  $region3: #{siamese_forward.1} parent=0 // pred_check_branch
    %14 = sbr.rel (0) target = $region5
  $region4: #{siamese_forward.1} parent=0 // pred_region
    _
  $region5: #{siamese_forward.1} parent=0 // pred_fallthru
    _
  // Predicated region
  $region6: #{siamese_forward.1} parent=0 // pred_check
    _
  $region7: #{siamese_forward.1} parent=0 // pred_check_branch
    %16 = sbr.rel (0) target = $region9
  $region8: #{siamese_forward.1} parent=0 // pred_region
    _
  $region9: #{siamese_forward.1} parent=0 // pred_fallthru
    _
  // Predicated region
  $region10: #{siamese_forward.1} parent=0 // pred_check
    _
  $region11: #{siamese_forward.1} parent=0 // pred_check_branch
    %18 = sbr.rel (0) target = $region13
  $region12: #{siamese_forward.1} parent=0 // pred_region
    _
  $region13: #{siamese_forward.1} parent=0 // pred_fallthru
    _
  // Predicated region
  $region14: #{siamese_forward.1} parent=0 // pred_check
    _
  $region15: #{siamese_forward.1} parent=0 // pred_check_branch
    %20 = sbr.rel (0) target = $region17
  $region16: #{siamese_forward.1} parent=0 // pred_region
    _
  $region17: #{siamese_forward.1} parent=0 // pred_fallthru
    _
  // Predicated region
  $region18: #{siamese_forward.1} parent=0 // pred_check
    _
  $region19: #{siamese_forward.1} parent=0 // pred_check_branch
    %22 = sbr.rel (0) target = $region21
  $region20: #{siamese_forward.1} parent=0 // pred_region
    _
  $region21: #{siamese_forward.1} parent=0 // pred_fallthru
    _
  // Predicated region
  $region22: #{siamese_forward.1} parent=0 // pred_check
    _
  $region23: #{siamese_forward.1} parent=0 // pred_check_branch
    %24 = sbr.rel (0) target = $region25
  $region24: #{siamese_forward.1} parent=0 // pred_region
    _
  $region25: #{siamese_forward.1} parent=0 // pred_fallthru
    _
  %v26 = vld [vmem:[%s0] sm:$0xff]
  %v27 = vld [vmem:[%s0 + $0x8] sm:$0xff]
  %v28 = vld [vmem:[%s0 + $0x10] sm:$0xff]
  %v29 = vld [vmem:[%s0 + $0x18] sm:$0xff]
  %v30 = vld [vmem:[%s0 + $0x20] sm:$0xff]
  %v31 = vld [vmem:[%s0 + $0x28] sm:$0xff]
  %v32 = vld [vmem:[%s0 + $0x30] sm:$0xff]
  %v33 = vld [vmem:[%s0 + $0x38] sm:$0xff]
  %v34 = vld [vmem:[%s0 + $0x40] sm:$0xff]
  %v35 = vld [vmem:[%s0 + $0x48] sm:$0xff]
  %v36 = vld [vmem:[%s0 + $0x50] sm:$0xff]
  %v37 = vld [vmem:[%s0 + $0x58] sm:$0xff]
  %v38 = vld [vmem:[%s0 + $0x60] sm:$0xff]
  %v39 = vld [vmem:[%s0 + $0x68] sm:$0xff]
  %v40 = vld [vmem:[%s0 + $0x70] sm:$0xff]
  %v41 = vld [vmem:[%s0 + $0x78] sm:$0xff]
  %v42 = vpack.c.bf16 %v34, %v26
  %v43 = vpack.c.bf16 %v35, %v27
  %v44 = vpack.c.bf16 %v36, %v28
  %v45 = vpack.c.bf16 %v37, %v29
  %v46 = vpack.c.bf16 %v38, %v30
  %v47 = vpack.c.bf16 %v39, %v31
  %v48 = vpack.c.bf16 %v40, %v32
  %v49 = vpack.c.bf16 %v41, %v33
  %50 = vst [vmem:[#allocation2] sm:$0xff] %v42
  %51 = vst [vmem:[#allocation2 + $0x8] sm:$0xff] %v43
  %52 = vst [vmem:[#allocation2 + $0x10] sm:$0xff] %v44
  %53 = vst [vmem:[#allocation2 + $0x18] sm:$0xff] %v45
  %54 = vst [vmem:[#allocation2 + $0x20] sm:$0xff] %v46
  %55 = vst [vmem:[#allocation2 + $0x28] sm:$0xff] %v47
  %56 = vst [vmem:[#allocation2 + $0x30] sm:$0xff] %v48
  %57 = vst [vmem:[#allocation2 + $0x38] sm:$0xff] %v49
  %v58 = vld [vmem:[%s1] sm:$0xff]
  %v59 = vld [vmem:[%s1 + $0x8] sm:$0xff]
  %v60 = vld [vmem:[%s1 + $0x10] sm:$0xff]
  %v61 = vld [vmem:[%s1 + $0x18] sm:$0xff]
  %v62 = vld [vmem:[%s1 + $0x20] sm:$0xff]
  %v63 = vld [vmem:[%s1 + $0x28] sm:$0xff]
  %v64 = vld [vmem:[%s1 + $0x30] sm:$0xff]
  %v65 = vld [vmem:[%s1 + $0x38] sm:$0xff]
  %v66 = vld [vmem:[%s1 + $0x40] sm:$0xff]
  %v67 = vld [vmem:[%s1 + $0x48] sm:$0xff]
  %v68 = vld [vmem:[%s1 + $0x50] sm:$0xff]
  %v69 = vld [vmem:[%s1 + $0x58] sm:$0xff]
  %v70 = vld [vmem:[%s1 + $0x60] sm:$0xff]
  %v71 = vld [vmem:[%s1 + $0x68] sm:$0xff]
  %v72 = vld [vmem:[%s1 + $0x70] sm:$0xff]
  %v73 = vld [vmem:[%s1 + $0x78] sm:$0xff]
  %v74 = vpack.c.bf16 %v66, %v58
  %v75 = vpack.c.bf16 %v67, %v59
  %v76 = vpack.c.bf16 %v68, %v60
  %v77 = vpack.c.bf16 %v69, %v61
  %v78 = vpack.c.bf16 %v70, %v62
  %v79 = vpack.c.bf16 %v71, %v63
  %v80 = vpack.c.bf16 %v72, %v64
  %v81 = vpack.c.bf16 %v73, %v65
  %82 = vst [vmem:[#allocation2 + $0x40] sm:$0xff] %v74
  %83 = vst [vmem:[#allocation2 + $0x48] sm:$0xff] %v75
  %84 = vst [vmem:[#allocation2 + $0x50] sm:$0xff] %v76
  %85 = vst [vmem:[#allocation2 + $0x58] sm:$0xff] %v77
  %86 = vst [vmem:[#allocation2 + $0x60] sm:$0xff] %v78
  %87 = vst [vmem:[#allocation2 + $0x68] sm:$0xff] %v79
  %88 = vst [vmem:[#allocation2 + $0x70] sm:$0xff] %v80
  %89 = vst [vmem:[#allocation2 + $0x78] sm:$0xff] %v81
  %v90 = vld [vmem:[#allocation2] sm:$0xff]
  %v91 = vld [vmem:[#allocation2 + $0x8] sm:$0xff]
  %v92 = vld [vmem:[#allocation2 + $0x10] sm:$0xff]
  %v93 = vld [vmem:[#allocation2 + $0x18] sm:$0xff]
  %v94 = vld [vmem:[#allocation2 + $0x20] sm:$0xff]
  %v95 = vld [vmem:[#allocation2 + $0x28] sm:$0xff]
  %v96 = vld [vmem:[#allocation2 + $0x30] sm:$0xff]
  %v97 = vld [vmem:[#allocation2 + $0x38] sm:$0xff]
  %v98 = vld [vmem:[#allocation2 + $0x40] sm:$0xff]
  %v99 = vld [vmem:[#allocation2 + $0x48] sm:$0xff]
  %v100 = vld [vmem:[#allocation2 + $0x50] sm:$0xff]
  %v101 = vld [vmem:[#allocation2 + $0x58] sm:$0xff]
  %v102 = vld [vmem:[#allocation2 + $0x60] sm:$0xff]
  %v103 = vld [vmem:[#allocation2 + $0x68] sm:$0xff]
  %v104 = vld [vmem:[#allocation2 + $0x70] sm:$0xff]
  %v105 = vld [vmem:[#allocation2 + $0x78] sm:$0xff]
  %v106 = vld [vmem:[%s2] sm:$0xf]
  %v107 = vld [vmem:[%s2 + $0x4] sm:$0xf]
  %v108 = vld [vmem:[%s2 + $0x8] sm:$0xf]
  %v109 = vld [vmem:[%s2 + $0xc] sm:$0xf]
  %v110 = vld [vmem:[%s2 + $0x10] sm:$0xf]
  %v111 = vld [vmem:[%s2 + $0x14] sm:$0xf]
  %v112 = vld [vmem:[%s2 + $0x18] sm:$0xf]
  %v113 = vld [vmem:[%s2 + $0x1c] sm:$0xf]
  %v114 = vld [vmem:[%s2 + $0x20] sm:$0xf]
  %v115 = vld [vmem:[%s2 + $0x24] sm:$0xf]
  %v116 = vld [vmem:[%s2 + $0x28] sm:$0xf]
  %v117 = vld [vmem:[%s2 + $0x2c] sm:$0xf]
  %v118 = vld [vmem:[%s2 + $0x30] sm:$0xf]
  %v119 = vld [vmem:[%s2 + $0x34] sm:$0xf]
  %v120 = vld [vmem:[%s2 + $0x38] sm:$0xf]
  %v121 = vld [vmem:[%s2 + $0x3c] sm:$0xf]
  %v122 = vld [vmem:[%s2 + $0x40] sm:$0xf]
  %v123 = vld [vmem:[%s2 + $0x44] sm:$0xf]
  %v124 = vld [vmem:[%s2 + $0x48] sm:$0xf]
  %v125 = vld [vmem:[%s2 + $0x4c] sm:$0xf]
  %v126 = vld [vmem:[%s2 + $0x50] sm:$0xf]
  %v127 = vld [vmem:[%s2 + $0x54] sm:$0xf]
  %v128 = vld [vmem:[%s2 + $0x58] sm:$0xf]
  %v129 = vld [vmem:[%s2 + $0x5c] sm:$0xf]
  %v130 = vld [vmem:[%s2 + $0x60] sm:$0xf]
  %v131 = vld [vmem:[%s2 + $0x64] sm:$0xf]
  %v132 = vld [vmem:[%s2 + $0x68] sm:$0xf]
  %v133 = vld [vmem:[%s2 + $0x6c] sm:$0xf]
  %v134 = vld [vmem:[%s2 + $0x70] sm:$0xf]
  %v135 = vld [vmem:[%s2 + $0x74] sm:$0xf]
  %v136 = vld [vmem:[%s2 + $0x78] sm:$0xf]
  %v137 = vld [vmem:[%s2 + $0x7c] sm:$0xf]
  %v138 = vld [vmem:[%s2 + $0x80] sm:$0xf]
  %v139 = vld [vmem:[%s2 + $0x84] sm:$0xf]
  %v140 = vld [vmem:[%s2 + $0x88] sm:$0xf]
  %v141 = vld [vmem:[%s2 + $0x8c] sm:$0xf]
  %v142 = vld [vmem:[%s2 + $0x90] sm:$0xf]
  %v143 = vld [vmem:[%s2 + $0x94] sm:$0xf]
  %v144 = vld [vmem:[%s2 + $0x98] sm:$0xf]
  %v145 = vld [vmem:[%s2 + $0x9c] sm:$0xf]
  %v146 = vld [vmem:[%s2 + $0xa0] sm:$0xf]
  %v147 = vld [vmem:[%s2 + $0xa4] sm:$0xf]
  %v148 = vld [vmem:[%s2 + $0xa8] sm:$0xf]
  %v149 = vld [vmem:[%s2 + $0xac] sm:$0xf]
  %v150 = vld [vmem:[%s2 + $0xb0] sm:$0xf]
  %v151 = vld [vmem:[%s2 + $0xb4] sm:$0xf]
  %v152 = vld [vmem:[%s2 + $0xb8] sm:$0xf]
  %v153 = vld [vmem:[%s2 + $0xbc] sm:$0xf]
  %v154 = vld [vmem:[%s2 + $0xc0] sm:$0xf]
  %v155 = vld [vmem:[%s2 + $0xc4] sm:$0xf]
  %v156 = vld [vmem:[%s2 + $0xc8] sm:$0xf]
  %v157 = vld [vmem:[%s2 + $0xcc] sm:$0xf]
  %v158 = vld [vmem:[%s2 + $0xd0] sm:$0xf]
  %v159 = vld [vmem:[%s2 + $0xd4] sm:$0xf]
  %v160 = vld [vmem:[%s2 + $0xd8] sm:$0xf]
  %v161 = vld [vmem:[%s2 + $0xdc] sm:$0xf]
  %v162 = vld [vmem:[%s2 + $0xe0] sm:$0xf]
  %v163 = vld [vmem:[%s2 + $0xe4] sm:$0xf]
  %v164 = vld [vmem:[%s2 + $0xe8] sm:$0xf]
  %v165 = vld [vmem:[%s2 + $0xec] sm:$0xf]
  %v166 = vld [vmem:[%s2 + $0xf0] sm:$0xf]
  %v167 = vld [vmem:[%s2 + $0xf4] sm:$0xf]
  %v168 = vld [vmem:[%s2 + $0xf8] sm:$0xf]
  %v169 = vld [vmem:[%s2 + $0xfc] sm:$0xf]
  %v170 = vld [vmem:[%s2 + $0x100] sm:$0xf]
  %v171 = vld [vmem:[%s2 + $0x104] sm:$0xf]
  %v172 = vld [vmem:[%s2 + $0x108] sm:$0xf]
  %v173 = vld [vmem:[%s2 + $0x10c] sm:$0xf]
  %v174 = vld [vmem:[%s2 + $0x110] sm:$0xf]
  %v175 = vld [vmem:[%s2 + $0x114] sm:$0xf]
  %v176 = vld [vmem:[%s2 + $0x118] sm:$0xf]
  %v177 = vld [vmem:[%s2 + $0x11c] sm:$0xf]
  %v178 = vld [vmem:[%s2 + $0x120] sm:$0xf]
  %v179 = vld [vmem:[%s2 + $0x124] sm:$0xf]
  %v180 = vld [vmem:[%s2 + $0x128] sm:$0xf]
  %v181 = vld [vmem:[%s2 + $0x12c] sm:$0xf]
  %v182 = vld [vmem:[%s2 + $0x130] sm:$0xf]
  %v183 = vld [vmem:[%s2 + $0x134] sm:$0xf]
  %v184 = vld [vmem:[%s2 + $0x138] sm:$0xf]
  %v185 = vld [vmem:[%s2 + $0x13c] sm:$0xf]
  %v186 = vld [vmem:[%s2 + $0x140] sm:$0xf]
  %v187 = vld [vmem:[%s2 + $0x144] sm:$0xf]
  %v188 = vld [vmem:[%s2 + $0x148] sm:$0xf]
  %v189 = vld [vmem:[%s2 + $0x14c] sm:$0xf]
  %v190 = vld [vmem:[%s2 + $0x150] sm:$0xf]
  %v191 = vld [vmem:[%s2 + $0x154] sm:$0xf]
  %v192 = vld [vmem:[%s2 + $0x158] sm:$0xf]
  %v193 = vld [vmem:[%s2 + $0x15c] sm:$0xf]
  %v194 = vld [vmem:[%s2 + $0x160] sm:$0xf]
  %v195 = vld [vmem:[%s2 + $0x164] sm:$0xf]
  %v196 = vld [vmem:[%s2 + $0x168] sm:$0xf]
  %v197 = vld [vmem:[%s2 + $0x16c] sm:$0xf]
  %v198 = vld [vmem:[%s2 + $0x170] sm:$0xf]
  %v199 = vld [vmem:[%s2 + $0x174] sm:$0xf]
  %v200 = vld [vmem:[%s2 + $0x178] sm:$0xf]
  %v201 = vld [vmem:[%s2 + $0x17c] sm:$0xf]
  %v202 = vld [vmem:[%s2 + $0x180] sm:$0xf]
  %v203 = vld [vmem:[%s2 + $0x184] sm:$0xf]
  %v204 = vld [vmem:[%s2 + $0x188] sm:$0xf]
  %v205 = vld [vmem:[%s2 + $0x18c] sm:$0xf]
  %v206 = vld [vmem:[%s2 + $0x190] sm:$0xf]
  %v207 = vld [vmem:[%s2 + $0x194] sm:$0xf]
  %v208 = vld [vmem:[%s2 + $0x198] sm:$0xf]
  %v209 = vld [vmem:[%s2 + $0x19c] sm:$0xf]
  %v210 = vld [vmem:[%s2 + $0x1a0] sm:$0xf]
  %v211 = vld [vmem:[%s2 + $0x1a4] sm:$0xf]
  %v212 = vld [vmem:[%s2 + $0x1a8] sm:$0xf]
  %v213 = vld [vmem:[%s2 + $0x1ac] sm:$0xf]
  %v214 = vld [vmem:[%s2 + $0x1b0] sm:$0xf]
  %v215 = vld [vmem:[%s2 + $0x1b4] sm:$0xf]
  %v216 = vld [vmem:[%s2 + $0x1b8] sm:$0xf]
  %v217 = vld [vmem:[%s2 + $0x1bc] sm:$0xf]
  %v218 = vld [vmem:[%s2 + $0x1c0] sm:$0xf]
  %v219 = vld [vmem:[%s2 + $0x1c4] sm:$0xf]
  %v220 = vld [vmem:[%s2 + $0x1c8] sm:$0xf]
  %v221 = vld [vmem:[%s2 + $0x1cc] sm:$0xf]
  %v222 = vld [vmem:[%s2 + $0x1d0] sm:$0xf]
  %v223 = vld [vmem:[%s2 + $0x1d4] sm:$0xf]
  %v224 = vld [vmem:[%s2 + $0x1d8] sm:$0xf]
  %v225 = vld [vmem:[%s2 + $0x1dc] sm:$0xf]
  %v226 = vld [vmem:[%s2 + $0x1e0] sm:$0xf]
  %v227 = vld [vmem:[%s2 + $0x1e4] sm:$0xf]
  %v228 = vld [vmem:[%s2 + $0x1e8] sm:$0xf]
  %v229 = vld [vmem:[%s2 + $0x1ec] sm:$0xf]
  %v230 = vld [vmem:[%s2 + $0x1f0] sm:$0xf]
  %v231 = vld [vmem:[%s2 + $0x1f4] sm:$0xf]
  %v232 = vld [vmem:[%s2 + $0x1f8] sm:$0xf]
  %v233 = vld [vmem:[%s2 + $0x1fc] sm:$0xf]
  %v234 = vld [vmem:[%s3] sm:$0x1]
  %v236 = vlaneseq
  %v237 = vshrl.u32 %v236, 7
  %v238 = vsub.s32 0, %v237
  %v239 = vrot.slane %v234, %v238
  %v369 = vunpack.c.l.b16 %v106
  %v370 = vunpack.c.l.b16 %v107
  %v371 = vunpack.c.l.b16 %v108
  %v372 = vunpack.c.l.b16 %v109
  %v373 = vunpack.c.l.b16 %v110
  %v374 = vunpack.c.l.b16 %v111
  %v375 = vunpack.c.l.b16 %v112
  %v376 = vunpack.c.l.b16 %v113
  %v377 = vunpack.c.l.b16 %v114
  %v378 = vunpack.c.l.b16 %v115
  %v379 = vunpack.c.l.b16 %v116
  %v380 = vunpack.c.l.b16 %v117
  %v381 = vunpack.c.l.b16 %v118
  %v382 = vunpack.c.l.b16 %v119
  %v383 = vunpack.c.l.b16 %v120
  %v384 = vunpack.c.l.b16 %v121
  %v385 = vunpack.c.l.b16 %v122
  %v386 = vunpack.c.l.b16 %v123
  %v387 = vunpack.c.l.b16 %v124
  %v388 = vunpack.c.l.b16 %v125
  %v389 = vunpack.c.l.b16 %v126
  %v390 = vunpack.c.l.b16 %v127
  %v391 = vunpack.c.l.b16 %v128
  %v392 = vunpack.c.l.b16 %v129
  %v393 = vunpack.c.l.b16 %v130
  %v394 = vunpack.c.l.b16 %v131
  %v395 = vunpack.c.l.b16 %v132
  %v396 = vunpack.c.l.b16 %v133
  %v397 = vunpack.c.l.b16 %v134
  %v398 = vunpack.c.l.b16 %v135
  %v399 = vunpack.c.l.b16 %v136
  %v400 = vunpack.c.l.b16 %v137
  %v401 = vunpack.c.l.b16 %v138
  %v402 = vunpack.c.l.b16 %v139
  %v403 = vunpack.c.l.b16 %v140
  %v404 = vunpack.c.l.b16 %v141
  %v405 = vunpack.c.l.b16 %v142
  %v406 = vunpack.c.l.b16 %v143
  %v407 = vunpack.c.l.b16 %v144
  %v408 = vunpack.c.l.b16 %v145
  %v409 = vunpack.c.l.b16 %v146
  %v410 = vunpack.c.l.b16 %v147
  %v411 = vunpack.c.l.b16 %v148
  %v412 = vunpack.c.l.b16 %v149
  %v413 = vunpack.c.l.b16 %v150
  %v414 = vunpack.c.l.b16 %v151
  %v415 = vunpack.c.l.b16 %v152
  %v416 = vunpack.c.l.b16 %v153
  %v417 = vunpack.c.l.b16 %v154
  %v418 = vunpack.c.l.b16 %v155
  %v419 = vunpack.c.l.b16 %v156
  %v420 = vunpack.c.l.b16 %v157
  %v421 = vunpack.c.l.b16 %v158
  %v422 = vunpack.c.l.b16 %v159
  %v423 = vunpack.c.l.b16 %v160
  %v424 = vunpack.c.l.b16 %v161
  %v425 = vunpack.c.l.b16 %v162
  %v426 = vunpack.c.l.b16 %v163
  %v427 = vunpack.c.l.b16 %v164
  %v428 = vunpack.c.l.b16 %v165
  %v429 = vunpack.c.l.b16 %v166
  %v430 = vunpack.c.l.b16 %v167
  %v431 = vunpack.c.l.b16 %v168
  %v432 = vunpack.c.l.b16 %v169
  %v433 = vunpack.c.l.b16 %v170
  %v434 = vunpack.c.l.b16 %v171
  %v435 = vunpack.c.l.b16 %v172
  %v436 = vunpack.c.l.b16 %v173
  %v437 = vunpack.c.l.b16 %v174
  %v438 = vunpack.c.l.b16 %v175
  %v439 = vunpack.c.l.b16 %v176
  %v440 = vunpack.c.l.b16 %v177
  %v441 = vunpack.c.l.b16 %v178
  %v442 = vunpack.c.l.b16 %v179
  %v443 = vunpack.c.l.b16 %v180
  %v444 = vunpack.c.l.b16 %v181
  %v445 = vunpack.c.l.b16 %v182
  %v446 = vunpack.c.l.b16 %v183
  %v447 = vunpack.c.l.b16 %v184
  %v448 = vunpack.c.l.b16 %v185
  %v449 = vunpack.c.l.b16 %v186
  %v450 = vunpack.c.l.b16 %v187
  %v451 = vunpack.c.l.b16 %v188
  %v452 = vunpack.c.l.b16 %v189
  %v453 = vunpack.c.l.b16 %v190
  %v454 = vunpack.c.l.b16 %v191
  %v455 = vunpack.c.l.b16 %v192
  %v456 = vunpack.c.l.b16 %v193
  %v457 = vunpack.c.l.b16 %v194
  %v458 = vunpack.c.l.b16 %v195
  %v459 = vunpack.c.l.b16 %v196
  %v460 = vunpack.c.l.b16 %v197
  %v461 = vunpack.c.l.b16 %v198
  %v462 = vunpack.c.l.b16 %v199
  %v463 = vunpack.c.l.b16 %v200
  %v464 = vunpack.c.l.b16 %v201
  %v465 = vunpack.c.l.b16 %v202
  %v466 = vunpack.c.l.b16 %v203
  %v467 = vunpack.c.l.b16 %v204
  %v468 = vunpack.c.l.b16 %v205
  %v469 = vunpack.c.l.b16 %v206
  %v470 = vunpack.c.l.b16 %v207
  %v471 = vunpack.c.l.b16 %v208
  %v472 = vunpack.c.l.b16 %v209
  %v473 = vunpack.c.l.b16 %v210
  %v474 = vunpack.c.l.b16 %v211
  %v475 = vunpack.c.l.b16 %v212
  %v476 = vunpack.c.l.b16 %v213
  %v477 = vunpack.c.l.b16 %v214
  %v478 = vunpack.c.l.b16 %v215
  %v479 = vunpack.c.l.b16 %v216
  %v480 = vunpack.c.l.b16 %v217
  %v481 = vunpack.c.l.b16 %v218
  %v482 = vunpack.c.l.b16 %v219
  %v483 = vunpack.c.l.b16 %v220
  %v484 = vunpack.c.l.b16 %v221
  %v485 = vunpack.c.l.b16 %v222
  %v486 = vunpack.c.l.b16 %v223
  %v487 = vunpack.c.l.b16 %v224
  %v488 = vunpack.c.l.b16 %v225
  %v489 = vunpack.c.l.b16 %v226
  %v490 = vunpack.c.l.b16 %v227
  %v491 = vunpack.c.l.b16 %v228
  %v492 = vunpack.c.l.b16 %v229
  %v493 = vunpack.c.l.b16 %v230
  %v494 = vunpack.c.l.b16 %v231
  %v495 = vunpack.c.l.b16 %v232
  %v496 = vunpack.c.l.b16 %v233
  %v497 = vpack.c.b16 %v370, %v369
  %v498 = vpack.c.b16 %v372, %v371
  %v499 = vpack.c.b16 %v374, %v373
  %v500 = vpack.c.b16 %v376, %v375
  %v501 = vpack.c.b16 %v378, %v377
  %v502 = vpack.c.b16 %v380, %v379
  %v503 = vpack.c.b16 %v382, %v381
  %v504 = vpack.c.b16 %v384, %v383
  %v505 = vpack.c.b16 %v386, %v385
  %v506 = vpack.c.b16 %v388, %v387
  %v507 = vpack.c.b16 %v390, %v389
  %v508 = vpack.c.b16 %v392, %v391
  %v509 = vpack.c.b16 %v394, %v393
  %v510 = vpack.c.b16 %v396, %v395
  %v511 = vpack.c.b16 %v398, %v397
  %v512 = vpack.c.b16 %v400, %v399
  %v513 = vpack.c.b16 %v402, %v401
  %v514 = vpack.c.b16 %v404, %v403
  %v515 = vpack.c.b16 %v406, %v405
  %v516 = vpack.c.b16 %v408, %v407
  %v517 = vpack.c.b16 %v410, %v409
  %v518 = vpack.c.b16 %v412, %v411
  %v519 = vpack.c.b16 %v414, %v413
  %v520 = vpack.c.b16 %v416, %v415
  %v521 = vpack.c.b16 %v418, %v417
  %v522 = vpack.c.b16 %v420, %v419
  %v523 = vpack.c.b16 %v422, %v421
  %v524 = vpack.c.b16 %v424, %v423
  %v525 = vpack.c.b16 %v426, %v425
  %v526 = vpack.c.b16 %v428, %v427
  %v527 = vpack.c.b16 %v430, %v429
  %v528 = vpack.c.b16 %v432, %v431
  %v529 = vpack.c.b16 %v434, %v433
  %v530 = vpack.c.b16 %v436, %v435
  %v531 = vpack.c.b16 %v438, %v437
  %v532 = vpack.c.b16 %v440, %v439
  %v533 = vpack.c.b16 %v442, %v441
  %v534 = vpack.c.b16 %v444, %v443
  %v535 = vpack.c.b16 %v446, %v445
  %v536 = vpack.c.b16 %v448, %v447
  %v537 = vpack.c.b16 %v450, %v449
  %v538 = vpack.c.b16 %v452, %v451
  %v539 = vpack.c.b16 %v454, %v453
  %v540 = vpack.c.b16 %v456, %v455
  %v541 = vpack.c.b16 %v458, %v457
  %v542 = vpack.c.b16 %v460, %v459
  %v543 = vpack.c.b16 %v462, %v461
  %v544 = vpack.c.b16 %v464, %v463
  %v545 = vpack.c.b16 %v466, %v465
  %v546 = vpack.c.b16 %v468, %v467
  %v547 = vpack.c.b16 %v470, %v469
  %v548 = vpack.c.b16 %v472, %v471
  %v549 = vpack.c.b16 %v474, %v473
  %v550 = vpack.c.b16 %v476, %v475
  %v551 = vpack.c.b16 %v478, %v477
  %v552 = vpack.c.b16 %v480, %v479
  %v553 = vpack.c.b16 %v482, %v481
  %v554 = vpack.c.b16 %v484, %v483
  %v555 = vpack.c.b16 %v486, %v485
  %v556 = vpack.c.b16 %v488, %v487
  %v557 = vpack.c.b16 %v490, %v489
  %v558 = vpack.c.b16 %v492, %v491
  %v559 = vpack.c.b16 %v494, %v493
  %v560 = vpack.c.b16 %v496, %v495
  %625 = vmatprep.subr.bf16.mxu0 0
  %626 = vmatpush1.bf16.msra.mxu0 %v497
  %627 = vmatprep.subr.bf16.mxu0 0
  %628 = vmatpush1.bf16.msra.mxu0 %v498
  %629 = vmatprep.subr.bf16.mxu0 0
  %630 = vmatpush1.bf16.msra.mxu0 %v499
  %631 = vmatprep.subr.bf16.mxu0 0
  %632 = vmatpush1.bf16.msra.mxu0 %v500
  %633 = vmatprep.subr.bf16.mxu0 0
  %634 = vmatpush1.bf16.msra.mxu0 %v501
  %635 = vmatprep.subr.bf16.mxu0 0
  %636 = vmatpush1.bf16.msra.mxu0 %v502
  %637 = vmatprep.subr.bf16.mxu0 0
  %638 = vmatpush1.bf16.msra.mxu0 %v503
  %639 = vmatprep.subr.bf16.mxu0 0
  %640 = vmatpush1.bf16.msra.mxu0 %v504
  %641 = vmatprep.subr.bf16.mxu0 0
  %642 = vmatpush1.bf16.msra.mxu0 %v505
  %643 = vmatprep.subr.bf16.mxu0 0
  %644 = vmatpush1.bf16.msra.mxu0 %v506
  %645 = vmatprep.subr.bf16.mxu0 0
  %646 = vmatpush1.bf16.msra.mxu0 %v507
  %647 = vmatprep.subr.bf16.mxu0 0
  %648 = vmatpush1.bf16.msra.mxu0 %v508
  %649 = vmatprep.subr.bf16.mxu0 0
  %650 = vmatpush1.bf16.msra.mxu0 %v509
  %651 = vmatprep.subr.bf16.mxu0 0
  %652 = vmatpush1.bf16.msra.mxu0 %v510
  %653 = vmatprep.subr.bf16.mxu0 0
  %654 = vmatpush1.bf16.msra.mxu0 %v511
  %655 = vmatprep.subr.bf16.mxu0 0
  %656 = vmatpush1.bf16.msra.mxu0 %v512
  %657 = vmatprep.mubr.bf16.mxu0 %v91
  %658 = vmatmul.mubr.bf16.gmra.mrb[0].mxu0 %v90
  %v659 = vpop.f32.mrb[0].mxu0
  %v660 = vadd.f32 %v239, %v659
  %v661 = vpop.f32.mrb[0].mxu0
  %v662 = vpop.f32.mrb[0].mxu0
  %v663 = vadd.f32 %v239, %v662
  %v664 = vpop.f32.mrb[0].mxu0
  %665 = vmatprep.mubr.bf16.mxu0 %v99
  %666 = vmatmul.mubr.bf16.gmra.mrb[0].mxu0 %v98
  %v667 = vpop.f32.mrb[0].mxu0
  %v668 = vadd.f32 %v239, %v667
  %v669 = vpop.f32.mrb[0].mxu0
  %v670 = vpop.f32.mrb[0].mxu0
  %v671 = vadd.f32 %v239, %v670
  %v672 = vpop.f32.mrb[0].mxu0
  %673 = vdwg.mxu0
  %674 = vmatprep.subr.bf16.mxu0 0
  %675 = vmatpush1.bf16.msra.mxu0 %v513
  %676 = vmatprep.subr.bf16.mxu0 0
  %677 = vmatpush1.bf16.msra.mxu0 %v514
  %678 = vmatprep.subr.bf16.mxu0 0
  %679 = vmatpush1.bf16.msra.mxu0 %v515
  %680 = vmatprep.subr.bf16.mxu0 0
  %681 = vmatpush1.bf16.msra.mxu0 %v516
  %682 = vmatprep.subr.bf16.mxu0 0
  %683 = vmatpush1.bf16.msra.mxu0 %v517
  %684 = vmatprep.subr.bf16.mxu0 0
  %685 = vmatpush1.bf16.msra.mxu0 %v518
  %686 = vmatprep.subr.bf16.mxu0 0
  %687 = vmatpush1.bf16.msra.mxu0 %v519
  %688 = vmatprep.subr.bf16.mxu0 0
  %689 = vmatpush1.bf16.msra.mxu0 %v520
  %690 = vmatprep.subr.bf16.mxu0 0
  %691 = vmatpush1.bf16.msra.mxu0 %v521
  %692 = vmatprep.subr.bf16.mxu0 0
  %693 = vmatpush1.bf16.msra.mxu0 %v522
  %694 = vmatprep.subr.bf16.mxu0 0
  %695 = vmatpush1.bf16.msra.mxu0 %v523
  %696 = vmatprep.subr.bf16.mxu0 0
  %697 = vmatpush1.bf16.msra.mxu0 %v524
  %698 = vmatprep.subr.bf16.mxu0 0
  %699 = vmatpush1.bf16.msra.mxu0 %v525
  %700 = vmatprep.subr.bf16.mxu0 0
  %701 = vmatpush1.bf16.msra.mxu0 %v526
  %702 = vmatprep.subr.bf16.mxu0 0
  %703 = vmatpush1.bf16.msra.mxu0 %v527
  %704 = vmatprep.subr.bf16.mxu0 0
  %705 = vmatpush1.bf16.msra.mxu0 %v528
  %706 = vmatprep.mubr.bf16.mxu0 %v93
  %707 = vmatmul.mubr.bf16.gmra.mrb[0].mxu0 %v92
  %v708 = vpop.f32.mrb[0].mxu0
  %v709 = vadd.f32 %v660, %v708
  %v710 = vpop.f32.mrb[0].mxu0
  %v711 = vpop.f32.mrb[0].mxu0
  %v712 = vadd.f32 %v663, %v711
  %v713 = vpop.f32.mrb[0].mxu0
  %714 = vmatprep.mubr.bf16.mxu0 %v101
  %715 = vmatmul.mubr.bf16.gmra.mrb[0].mxu0 %v100
  %v716 = vpop.f32.mrb[0].mxu0
  %v717 = vadd.f32 %v668, %v716
  %v718 = vpop.f32.mrb[0].mxu0
  %v719 = vpop.f32.mrb[0].mxu0
  %v720 = vadd.f32 %v671, %v719
  %v721 = vpop.f32.mrb[0].mxu0
  %722 = vdwg.mxu0
  %723 = vmatprep.subr.bf16.mxu0 0
  %724 = vmatpush1.bf16.msra.mxu0 %v529
  %725 = vmatprep.subr.bf16.mxu0 0
  %726 = vmatpush1.bf16.msra.mxu0 %v530
  %727 = vmatprep.subr.bf16.mxu0 0
  %728 = vmatpush1.bf16.msra.mxu0 %v531
  %729 = vmatprep.subr.bf16.mxu0 0
  %730 = vmatpush1.bf16.msra.mxu0 %v532
  %731 = vmatprep.subr.bf16.mxu0 0
  %732 = vmatpush1.bf16.msra.mxu0 %v533
  %733 = vmatprep.subr.bf16.mxu0 0
  %734 = vmatpush1.bf16.msra.mxu0 %v534
  %735 = vmatprep.subr.bf16.mxu0 0
  %736 = vmatpush1.bf16.msra.mxu0 %v535
  %737 = vmatprep.subr.bf16.mxu0 0
  %738 = vmatpush1.bf16.msra.mxu0 %v536
  %739 = vmatprep.subr.bf16.mxu0 0
  %740 = vmatpush1.bf16.msra.mxu0 %v537
  %741 = vmatprep.subr.bf16.mxu0 0
  %742 = vmatpush1.bf16.msra.mxu0 %v538
  %743 = vmatprep.subr.bf16.mxu0 0
  %744 = vmatpush1.bf16.msra.mxu0 %v539
  %745 = vmatprep.subr.bf16.mxu0 0
  %746 = vmatpush1.bf16.msra.mxu0 %v540
  %747 = vmatprep.subr.bf16.mxu0 0
  %748 = vmatpush1.bf16.msra.mxu0 %v541
  %749 = vmatprep.subr.bf16.mxu0 0
  %750 = vmatpush1.bf16.msra.mxu0 %v542
  %751 = vmatprep.subr.bf16.mxu0 0
  %752 = vmatpush1.bf16.msra.mxu0 %v543
  %753 = vmatprep.subr.bf16.mxu0 0
  %754 = vmatpush1.bf16.msra.mxu0 %v544
  %755 = vmatprep.mubr.bf16.mxu0 %v95
  %756 = vmatmul.mubr.bf16.gmra.mrb[0].mxu0 %v94
  %v757 = vpop.f32.mrb[0].mxu0
  %v758 = vadd.f32 %v709, %v757
  %v759 = vpop.f32.mrb[0].mxu0
  %v760 = vpop.f32.mrb[0].mxu0
  %v761 = vadd.f32 %v712, %v760
  %v762 = vpop.f32.mrb[0].mxu0
  %763 = vmatprep.mubr.bf16.mxu0 %v103
  %764 = vmatmul.mubr.bf16.gmra.mrb[0].mxu0 %v102
  %v765 = vpop.f32.mrb[0].mxu0
  %v766 = vadd.f32 %v717, %v765
  %v767 = vpop.f32.mrb[0].mxu0
  %v768 = vpop.f32.mrb[0].mxu0
  %v769 = vadd.f32 %v720, %v768
  %v770 = vpop.f32.mrb[0].mxu0
  %771 = vdwg.mxu0
  %772 = vmatprep.subr.bf16.mxu0 0
  %773 = vmatpush1.bf16.msra.mxu0 %v545
  %774 = vmatprep.subr.bf16.mxu0 0
  %775 = vmatpush1.bf16.msra.mxu0 %v546
  %776 = vmatprep.subr.bf16.mxu0 0
  %777 = vmatpush1.bf16.msra.mxu0 %v547
  %778 = vmatprep.subr.bf16.mxu0 0
  %779 = vmatpush1.bf16.msra.mxu0 %v548
  %780 = vmatprep.subr.bf16.mxu0 0
  %781 = vmatpush1.bf16.msra.mxu0 %v549
  %782 = vmatprep.subr.bf16.mxu0 0
  %783 = vmatpush1.bf16.msra.mxu0 %v550
  %784 = vmatprep.subr.bf16.mxu0 0
  %785 = vmatpush1.bf16.msra.mxu0 %v551
  %786 = vmatprep.subr.bf16.mxu0 0
  %787 = vmatpush1.bf16.msra.mxu0 %v552
  %788 = vmatprep.subr.bf16.mxu0 0
  %789 = vmatpush1.bf16.msra.mxu0 %v553
  %790 = vmatprep.subr.bf16.mxu0 0
  %791 = vmatpush1.bf16.msra.mxu0 %v554
  %792 = vmatprep.subr.bf16.mxu0 0
  %793 = vmatpush1.bf16.msra.mxu0 %v555
  %794 = vmatprep.subr.bf16.mxu0 0
  %795 = vmatpush1.bf16.msra.mxu0 %v556
  %796 = vmatprep.subr.bf16.mxu0 0
  %797 = vmatpush1.bf16.msra.mxu0 %v557
  %798 = vmatprep.subr.bf16.mxu0 0
  %799 = vmatpush1.bf16.msra.mxu0 %v558
  %800 = vmatprep.subr.bf16.mxu0 0
  %801 = vmatpush1.bf16.msra.mxu0 %v559
  %802 = vmatprep.subr.bf16.mxu0 0
  %803 = vmatpush1.bf16.msra.mxu0 %v560
  %804 = vmatprep.mubr.bf16.mxu0 %v97
  %805 = vmatmul.mubr.bf16.gmra.mrb[0].mxu0 %v96
  %v806 = vpop.f32.mrb[0].mxu0
  %v807 = vadd.f32 %v758, %v806
  %v808 = vpop.f32.mrb[0].mxu0
  %v809 = vpop.f32.mrb[0].mxu0
  %v810 = vadd.f32 %v761, %v809
  %v811 = vpop.f32.mrb[0].mxu0
  %812 = vmatprep.mubr.bf16.mxu0 %v105
  %813 = vmatmul.mubr.bf16.gmra.mrb[0].mxu0 %v104
  %v814 = vpop.f32.mrb[0].mxu0
  %v815 = vadd.f32 %v766, %v814
  %v816 = vpop.f32.mrb[0].mxu0
  %v817 = vpop.f32.mrb[0].mxu0
  %v818 = vadd.f32 %v769, %v817
  %v819 = vpop.f32.mrb[0].mxu0
  %820 = vdwg.mxu0
  %v821 = vmax.f32 %v807, 0.0
  %v822 = vmax.f32 %v810, 0.0
  %v823 = vmax.f32 %v815, 0.0
  %v824 = vmax.f32 %v818, 0.0
  %v825 = vpack.c.bf16 %v822, %v821
  %v826 = vpack.c.bf16 %v824, %v823
  %v827 = vld [vmem:[%s4] sm:$0xf]
  %v828 = vld [vmem:[%s4 + $0x4] sm:$0xf]
  %v829 = vld [vmem:[%s4 + $0x8] sm:$0xf]
  %v830 = vld [vmem:[%s4 + $0xc] sm:$0xf]
  %v831 = vld [vmem:[%s4 + $0x10] sm:$0xf]
  %v832 = vld [vmem:[%s4 + $0x14] sm:$0xf]
  %v833 = vld [vmem:[%s4 + $0x18] sm:$0xf]
  %v834 = vld [vmem:[%s4 + $0x1c] sm:$0xf]
  %v835 = vld [vmem:[%s4 + $0x20] sm:$0xf]
  %v836 = vld [vmem:[%s4 + $0x24] sm:$0xf]
  %v837 = vld [vmem:[%s4 + $0x28] sm:$0xf]
  %v838 = vld [vmem:[%s4 + $0x2c] sm:$0xf]
  %v839 = vld [vmem:[%s4 + $0x30] sm:$0xf]
  %v840 = vld [vmem:[%s4 + $0x34] sm:$0xf]
  %v841 = vld [vmem:[%s4 + $0x38] sm:$0xf]
  %v842 = vld [vmem:[%s4 + $0x3c] sm:$0xf]
  %v843 = vld [vmem:[%s5] sm:$0x1]
  %v845 = vlaneseq
  %v846 = vshrl.u32 %v845, 7
  %v847 = vsub.s32 0, %v846
  %v848 = vrot.slane %v843, %v847
  %v866 = vunpack.c.l.b16 %v827
  %v867 = vunpack.c.l.b16 %v828
  %v868 = vunpack.c.l.b16 %v829
  %v869 = vunpack.c.l.b16 %v830
  %v870 = vunpack.c.l.b16 %v831
  %v871 = vunpack.c.l.b16 %v832
  %v872 = vunpack.c.l.b16 %v833
  %v873 = vunpack.c.l.b16 %v834
  %v874 = vunpack.c.l.b16 %v835
  %v875 = vunpack.c.l.b16 %v836
  %v876 = vunpack.c.l.b16 %v837
  %v877 = vunpack.c.l.b16 %v838
  %v878 = vunpack.c.l.b16 %v839
  %v879 = vunpack.c.l.b16 %v840
  %v880 = vunpack.c.l.b16 %v841
  %v881 = vunpack.c.l.b16 %v842
  %v882 = vpack.c.b16 %v867, %v866
  %v883 = vpack.c.b16 %v869, %v868
  %v884 = vpack.c.b16 %v871, %v870
  %v885 = vpack.c.b16 %v873, %v872
  %v886 = vpack.c.b16 %v875, %v874
  %v887 = vpack.c.b16 %v877, %v876
  %v888 = vpack.c.b16 %v879, %v878
  %v889 = vpack.c.b16 %v881, %v880
  %898 = vmatprep.subr.bf16.mxu0 0
  %899 = vmatpush1.bf16.msra.mxu0 %v882
  %900 = vmatprep.subr.bf16.mxu0 0
  %901 = vmatpush1.bf16.msra.mxu0 %v883
  %902 = vmatprep.subr.bf16.mxu0 0
  %903 = vmatpush1.bf16.msra.mxu0 %v884
  %904 = vmatprep.subr.bf16.mxu0 0
  %905 = vmatpush1.bf16.msra.mxu0 %v885
  %906 = vmatprep.subr.bf16.mxu0 0
  %907 = vmatpush1.bf16.msra.mxu0 %v886
  %908 = vmatprep.subr.bf16.mxu0 0
  %909 = vmatpush1.bf16.msra.mxu0 %v887
  %910 = vmatprep.subr.bf16.mxu0 0
  %911 = vmatpush1.bf16.msra.mxu0 %v888
  %912 = vmatprep.subr.bf16.mxu0 0
  %913 = vmatpush1.bf16.msra.mxu0 %v889
  %914 = vmatprep.subr.bf16.mxu0 0
  %915 = vmatpush1.bf16.msra.mxu0 0
  %916 = vmatprep.subr.bf16.mxu0 0
  %917 = vmatpush1.bf16.msra.mxu0 0
  %918 = vmatprep.subr.bf16.mxu0 0
  %919 = vmatpush1.bf16.msra.mxu0 0
  %920 = vmatprep.subr.bf16.mxu0 0
  %921 = vmatpush1.bf16.msra.mxu0 0
  %922 = vmatprep.subr.bf16.mxu0 0
  %923 = vmatpush1.bf16.msra.mxu0 0
  %924 = vmatprep.subr.bf16.mxu0 0
  %925 = vmatpush1.bf16.msra.mxu0 0
  %926 = vmatprep.subr.bf16.mxu0 0
  %927 = vmatpush1.bf16.msra.mxu0 0
  %928 = vmatprep.subr.bf16.mxu0 0
  %929 = vmatpush1.bf16.msra.mxu0 0
  %930 = vmatprep.mubr.bf16.mxu0 0
  %931 = vmatmul.mubr.bf16.gmra.mrb[0].mxu0 %v825
  %v932 = vpop.f32.mrb[0].mxu0
  %v933 = vadd.f32 %v848, %v932
  %v934 = vpop.f32.mrb[0].mxu0
  %v935 = vpop.f32.mrb[0].mxu0
  %v936 = vadd.f32 %v848, %v935
  %v937 = vpop.f32.mrb[0].mxu0
  %938 = vmatprep.mubr.bf16.mxu0 0
  %939 = vmatmul.mubr.bf16.gmra.mrb[0].mxu0 %v826
  %v940 = vpop.f32.mrb[0].mxu0
  %v941 = vadd.f32 %v848, %v940
  %v942 = vpop.f32.mrb[0].mxu0
  %v943 = vpop.f32.mrb[0].mxu0
  %v944 = vadd.f32 %v848, %v943
  %v945 = vpop.f32.mrb[0].mxu0
  %946 = vdwg.mxu0
  %947 = vst [vmem:[%s6] sm:$0xff] %v933
  %948 = vst [vmem:[%s6 + $0x8] sm:$0xff] %v936
  %949 = vst [vmem:[%s7] sm:$0xff] %v941
  %950 = vst [vmem:[%s7 + $0x8] sm:$0xff] %v944
  // Predicated region
  $region26: #{siamese_forward.1} parent=0 // pred_check
    _
  $region27: #{siamese_forward.1} parent=0 // pred_check_branch
    %952 = sbr.rel (0) target = $region29
  $region28: #{siamese_forward.1} parent=0 // pred_region
    _
  $region29: #{siamese_forward.1} parent=0 // pred_fallthru
    _
  // Predicated region
  $region30: #{siamese_forward.1} parent=0 // pred_check
    _
  $region31: #{siamese_forward.1} parent=0 // pred_check_branch
    %954 = sbr.rel (0) target = $region33
  $region32: #{siamese_forward.1} parent=0 // pred_region
    _
  $region33: #{siamese_forward.1} parent=0 // pred_fallthru
    _
  // Predicated region
  $region34: #{siamese_forward.1} parent=0 // pred_check
    _
  $region35: #{siamese_forward.1} parent=0 // pred_check_branch
    %956 = sbr.rel (0) target = $region37
  $region36: #{siamese_forward.1} parent=0 // pred_region
    _
  $region37: #{siamese_forward.1} parent=0 // pred_fallthru
    _
  // Predicated region
  $region38: #{siamese_forward.1} parent=0 // pred_check
    _
  $region39: #{siamese_forward.1} parent=0 // pred_check_branch
    %958 = sbr.rel (0) target = $region41
  $region40: #{siamese_forward.1} parent=0 // pred_region
    _
  $region41: #{siamese_forward.1} parent=0 // pred_fallthru
    _

</llo_original>
